<compile_context>
chip_gen: v7x
topology: tpu7x:2x2x1
jax: 0.10.0
libtpu: 0.0.40
codegen_flags: <defaults>
</compile_context>

<pallas_src>
import functools
import math

import jax
import jax.numpy as jnp
from jax.experimental import pallas as pl
from jax.experimental.pallas import tpu as pltpu


_ROW_ALIGN = 16      # sublane-friendly row-tile alignment (bf16 packs 16 rows/vreg)
_LANE = 128


def _cdiv(a, b):
    return -(-a // b)


def _round_up(a, b):
    return _cdiv(a, b) * b


@functools.lru_cache(maxsize=1)
def _vmem_capacity_bytes():
    """Physical VMEM per TensorCore (best effort, with a safe fallback)."""
    try:
        return int(pltpu.get_tpu_info().vmem_capacity_bytes)
    except Exception:
        pass
    try:
        kind = jax.devices()[0].device_kind.lower()
    except Exception:
        kind = ""
    if "v7" in kind:
        return 64 << 20
    if any(t in kind for t in ("v4", "v5", "v6")):
        return 128 << 20
    return 64 << 20          # unknown chip: stay conservative


def _conv_glu_kernel(*refs, n_groups):
    """Fused strided-conv + GLU for one (TM, Cout_p) output tile.

    refs = (x_0, ..., x_{G-1}, w, b, o)
      x_g: (1, TM, S*Cin_p)       stride-group view shifted by g rows (bf16)
      w:   (G, S*Cin_p, 2*Cout_p) fused conv weights, VMEM resident (bf16)
      b:   (1, 2*Cout_p)          f32 bias ([a half | gate half])
      o:   (1, TM, Cout_p)        GLU output tile
    """
    x_refs = refs[:n_groups]
    w_ref, b_ref, o_ref = refs[n_groups:]
    cout = o_ref.shape[-1]

    acc = jnp.dot(x_refs[0][0], w_ref[0], preferred_element_type=jnp.float32)
    for g in range(1, n_groups):
        acc = acc + jnp.dot(x_refs[g][0], w_ref[g],
                            preferred_element_type=jnp.float32)
    y = acc + b_ref[...]
    a = y[:, :cout]                      # lane-aligned split (cout % 128 == 0)
    gate = y[:, cout:]
    # sigmoid via EUP exp + EUP approx reciprocal (keeps the divide off the VALU)
    sig = pl.reciprocal(1.0 + jnp.exp(-gate), approx=True)
    o_ref[0] = (a * sig).astype(o_ref.dtype)


def pack_conv_glu_params(w, b, *, stride, cin_pad=None, cout_pad=None,
                         compute_dtype=jnp.bfloat16):
    """Pre-pack one torch-layout Conv1d weight (2*Cout, Cin, K) and bias (2*Cout,).

    Returns
      w_slab: (G, S*Cin_p, 2*Cout_p) in compute_dtype, lanes = [a half | gate half]
      bias:   (1, 2*Cout_p) f32
    Zero pads: taps K..G*S-1, input channels Cin..Cin_p-1 and output channels
    Cout..Cout_p-1 (each GLU half independently), where G = ceil(K / S).
    """
    two_cout, cin, k = w.shape
    cout = two_cout // 2
    s = stride
    g = _cdiv(k, s)
    cin_p = cin if cin_pad is None else max(cin_pad, cin)
    cout_p = cout if cout_pad is None else max(cout_pad, cout)

    wz = jnp.pad(w, ((0, 0), (0, cin_p - cin), (0, g * s - k)))
    wp = jnp.transpose(wz, (2, 1, 0)).reshape(g, s * cin_p, two_cout)
    wa = jnp.pad(wp[:, :, :cout], ((0, 0), (0, 0), (0, cout_p - cout)))
    wg = jnp.pad(wp[:, :, cout:], ((0, 0), (0, 0), (0, cout_p - cout)))
    w_slab = jnp.concatenate([wa, wg], axis=-1).astype(compute_dtype)

    ba = jnp.pad(b[:cout], (0, cout_p - cout))
    bg = jnp.pad(b[cout:], (0, cout_p - cout))
    bias = jnp.concatenate([ba, bg]).reshape(1, 2 * cout_p).astype(jnp.float32)
    return w_slab, bias


def pack_adaptor_params(torch_params, *, stride, compute_dtype=jnp.bfloat16):
    """Pack all layers consistently (channel padding chained between layers)."""
    packed = []
    for i, (w, b) in enumerate(torch_params):
        cin = w.shape[1]
        cout = w.shape[0] // 2
        if i == 0:
            # minimal padding so that S*Cin_p is a multiple of 128 (lane-full LHS)
            cin_pad = _round_up(cin, _LANE // math.gcd(stride, _LANE))
        else:
            cin_pad = packed[-1][0].shape[-1] // 2      # previous layer's Cout_p
        cout_pad = _round_up(cout, _LANE)
        packed.append(pack_conv_glu_params(
            w, b, stride=stride, cin_pad=cin_pad, cout_pad=cout_pad,
            compute_dtype=compute_dtype))
    return packed


def conv_glu_layer(h, w_slab, bias, *, kernel_size, stride, block_m=512):
    """One Conv1d(stride=S, padding=K//2) + GLU layer on (B, T, Cin_p) activations."""
    B, T, cin_p = h.shape
    K, S = kernel_size, stride
    P = K // 2
    G, scin, two_cout_p = w_slab.shape
    cout_p = two_cout_p // 2
    assert scin == S * cin_p, (scin, S, cin_p)
    assert G == _cdiv(K, S), (G, K, S)
    assert scin % _LANE == 0 and cout_p % _LANE == 0, (scin, cout_p)

    t_out = (T + 2 * P - K) // S + 1
    act_b = jnp.dtype(h.dtype).itemsize
    w_b = jnp.dtype(w_slab.dtype).itemsize

    def vmem_need(tm):
        return (G * 2 * tm * scin * act_b            # activation tiles (dbl-buffered)
                + G * scin * two_cout_p * w_b        # resident fused weight slab (1 buf)
                + two_cout_p * 4                     # bias (1 buf)
                + 2 * tm * cout_p * act_b            # output tiles (dbl-buffered)
                + 3 * tm * two_cout_p * 4)           # f32 accumulator + epilogue temps

    cap_hard = _vmem_capacity_bytes()
    cap_soft = int(0.85 * cap_hard)                  # ~54 MiB on v7x, ~109 MiB on v5e/v6e
    tm = max(_ROW_ALIGN, min(_round_up(block_m, _ROW_ALIGN),
                             _round_up(t_out, _ROW_ALIGN)))
    while tm > _ROW_ALIGN and vmem_need(tm) + (4 << 20) > cap_soft:
        tm = max(_ROW_ALIGN, _round_up(tm // 2, _ROW_ALIGN))
    nt = _cdiv(t_out, tm)
    mp = nt * tm

    need = vmem_need(tm)
    if need + (2 << 20) <= cap_soft:
        vmem_limit = int(min(max(need + (8 << 20), 16 << 20), cap_soft))
    else:   # oversized problem even at the minimum tile: best effort
        vmem_limit = int(min(need + (4 << 20), cap_hard))
    # TODO(synk): for weight slabs > ~16 MiB on v7x add an output-channel grid
    # axis instead of relying on a single resident slab.

    # Zero-padded timeline and the G row-shifted stride-group views:
    #   view g, row t  ==  padded positions [(t+g)*S, (t+g+1)*S) x Cin_p
    L = max((mp + G - 1) * S, T + P)
    hp = jnp.pad(h, ((0, 0), (P, L - T - P), (0, 0)))
    views = tuple(hp[:, g * S: g * S + mp * S, :].reshape(B, mp, scin)
                  for g in range(G))

    in_specs = ([pl.BlockSpec((1, tm, scin), lambda b, i: (b, i, 0))
                 for _ in range(G)]
                + [pl.BlockSpec(memory_space=pltpu.MemorySpace.VMEM),   # weights
                   pl.BlockSpec(memory_space=pltpu.MemorySpace.VMEM)])  # bias

    out = pl.pallas_call(
        functools.partial(_conv_glu_kernel, n_groups=G),
        out_shape=jax.ShapeDtypeStruct((B, mp, cout_p), h.dtype),
        grid_spec=pltpu.PrefetchScalarGridSpec(
            num_scalar_prefetch=0,
            grid=(B, nt),
            in_specs=in_specs,
            out_specs=pl.BlockSpec((1, tm, cout_p), lambda b, i: (b, i, 0)),
        ),
        compiler_params=pltpu.CompilerParams(
            dimension_semantics=("parallel", "parallel"),
            vmem_limit_bytes=vmem_limit,
        ),
    )(*views, w_slab, bias)
    return out[:, :t_out, :]


def conv1d_adaptor_forward(x, padding_mask, packed_params, *, out_dim,
                           kernel_size=3, stride=2, block_m=512,
                           compute_dtype=jnp.bfloat16):
    """Semantics of fairseq Conv1dAdaptor.forward (add_layernorm=False).

    x: (T, B, C_in); padding_mask: (B, T) bool, True = padded (or None).
    packed_params: list of (w_slab, bias) from pack_adaptor_params.
    Returns (out (T_out, B, out_dim) in x.dtype, out_padding_mask or None).
    """
    # TODO(synk): add_layernorm=True branch (per-layer LayerNorm) not implemented
    # since the module default is add_layernorm=False.
    h = jnp.transpose(x, (1, 0, 2)).astype(compute_dtype)     # (B, T, C), kept B,T,C
    cin_p0 = packed_params[0][0].shape[1] // stride
    if cin_p0 > h.shape[-1]:
        h = jnp.pad(h, ((0, 0), (0, 0), (0, cin_p0 - h.shape[-1])))
    for (w_slab, bias) in packed_params:
        h = conv_glu_layer(h, w_slab, bias, kernel_size=kernel_size,
                           stride=stride, block_m=block_m)
    out = jnp.transpose(h[..., :out_dim], (1, 0, 2)).astype(x.dtype)

    if padding_mask is None:
        out_padding_mask = None
    else:
        lengths = jnp.sum(jnp.logical_not(padding_mask), axis=1)
        out_len = lengths.astype(jnp.float32)
        for _ in packed_params:
            out_len = jnp.floor((out_len - 1.0) / stride + 1.0)
        out_len = out_len.astype(jnp.int32)
        t_out = out.shape[0]
        out_padding_mask = jnp.arange(t_out)[None, :] >= out_len[:, None]
    return out, out_padding_mask


def init_torch_params(key, in_dim, out_dim, n_layers=3, kernel_size=3):
    """Deterministic torch-style (uniform +-1/sqrt(fan_in)) Conv1d params."""
    params = []
    for i in range(n_layers):
        cin = in_dim if i == 0 else out_dim
        key, kw, kb = jax.random.split(key, 3)
        fan_in = cin * kernel_size
        bound = 1.0 / (fan_in ** 0.5)
        w = jax.random.uniform(kw, (2 * out_dim, cin, kernel_size),
                               jnp.float32, -bound, bound)
        b = jax.random.uniform(kb, (2 * out_dim,), jnp.float32, -bound, bound)
        params.append((w, b))
    return params


def _reference_forward(x, torch_params, *, kernel_size, stride, compute_dtype):
    """Pure-jnp reference with the same bf16-in / f32-accumulate policy."""
    h = jnp.transpose(x, (1, 0, 2)).astype(compute_dtype)
    for (w, b) in torch_params:
        B, T, Cin = h.shape
        P = kernel_size // 2
        t_out = (T + 2 * P - kernel_size) // stride + 1
        hp = jnp.pad(h, ((0, 0), (P, P), (0, 0)))
        idx = stride * jnp.arange(t_out)[:, None] + jnp.arange(kernel_size)[None, :]
        cols = hp[:, idx, :]                                    # (B, T_out, K, Cin)
        w2 = jnp.transpose(w, (2, 1, 0)).astype(compute_dtype)  # (K, Cin, 2Cout)
        y = jnp.einsum("btkc,kco->bto", cols.astype(jnp.float32),
                       w2.astype(jnp.float32)) + b[None, None, :]
        cout = w.shape[0] // 2
        h = (y[..., :cout] * jax.nn.sigmoid(y[..., cout:])).astype(compute_dtype)
    return jnp.transpose(h, (1, 0, 2)).astype(x.dtype)


if __name__ == "__main__":
    key = jax.random.PRNGKey(0)
    T, B, in_dim, out_dim = 8, 2, 32, 32
    kernel_size, stride, n_layers = 3, 2, 3
    kx, kp = jax.random.split(key)

    x = jax.random.normal(kx, (T, B, in_dim), dtype=jnp.float32)
    lengths = jnp.array([8, 5], dtype=jnp.int32)
    padding_mask = jnp.arange(T)[None, :] >= lengths[:, None]   # (B, T), True = pad

    torch_params = init_torch_params(kp, in_dim, out_dim,
                                     n_layers=n_layers, kernel_size=kernel_size)
    # Weight packing (fusion, tap/channel padding) is hoisted out of the forward.
    packed = pack_adaptor_params(torch_params, stride=stride)

    out, out_mask = conv1d_adaptor_forward(
        x, padding_mask, packed, out_dim=out_dim,
        kernel_size=kernel_size, stride=stride)
    jax.block_until_ready(out)
    jax.block_until_ready(out_mask)

    # 3 stride-2 layers: T 8 -> 4 -> 2 -> 1
    assert out.shape == (1, B, out_dim), out.shape
    assert out_mask.shape == (B, 1), out_mask.shape

    ref = _reference_forward(x, torch_params, kernel_size=kernel_size,
                             stride=stride, compute_dtype=jnp.bfloat16)
    err = float(jnp.max(jnp.abs(out.astype(jnp.float32) - ref.astype(jnp.float32))))
    assert err < 5e-2, err

    print("KERNEL_OK")
</pallas_src>

<mosaic_0001>
module attributes {stable_mosaic.version = 11 : i64} {
  func.func @_conv_glu_kernel(%arg0: i32, %arg1: i32, %arg2: memref<1x16x128xbf16, #tpu.memory_space<vmem>>, %arg3: memref<1x16x128xbf16, #tpu.memory_space<vmem>>, %arg4: memref<2x128x256xbf16, #tpu.memory_space<vmem>>, %arg5: memref<1x256xf32, #tpu.memory_space<vmem>>, %arg6: memref<1x16x128xbf16, #tpu.memory_space<vmem>>) attributes {dimension_semantics = [#tpu.dimension_semantics<parallel>, #tpu.dimension_semantics<parallel>], iteration_bounds = array<i64: 2, 1>, scalar_prefetch = 0 : i64, scratch_operands = 0 : i64, tpu.core_type = #tpu.core_type<tc>, window_params = [{transform_indices = @transform_0, window_bounds = array<i64: 1, 16, 128>}, {transform_indices = @transform_1, window_bounds = array<i64: 1, 16, 128>}, {pipeline_mode = #tpu.pipeline_mode<synchronous>, transform_indices = @transform_2, window_bounds = array<i64: 2, 128, 256>}, {pipeline_mode = #tpu.pipeline_mode<synchronous>, transform_indices = @transform_3, window_bounds = array<i64: 1, 256>}, {transform_indices = @transform_4, window_bounds = array<i64: 1, 16, 128>}]} {
    %c0 = arith.constant 0 : index
    %c0_0 = arith.constant 0 : index
    %c0_1 = arith.constant 0 : index
    %0 = vector.load %arg2[%c0, %c0_0, %c0_1] : memref<1x16x128xbf16, #tpu.memory_space<vmem>>, vector<1x16x128xbf16>
    %1 = vector.shape_cast %0 : vector<1x16x128xbf16> to vector<16x128xbf16>
    %c0_2 = arith.constant 0 : index
    %c0_3 = arith.constant 0 : index
    %c0_4 = arith.constant 0 : index
    %2 = vector.load %arg4[%c0_2, %c0_3, %c0_4] : memref<2x128x256xbf16, #tpu.memory_space<vmem>>, vector<1x128x256xbf16>
    %3 = vector.shape_cast %2 : vector<1x128x256xbf16> to vector<128x256xbf16>
    %cst = arith.constant dense<0.000000e+00> : vector<16x256xf32>
    %4 = tpu.matmul %1, %3, %cst {dimension_numbers = #tpu.dot_dimension_numbers<[1], [0], [0], [1], [0, 0, 1, 1], [], []>} : vector<16x128xbf16>, vector<128x256xbf16>, vector<16x256xf32> -> vector<16x256xf32>
    %c0_5 = arith.constant 0 : index
    %c0_6 = arith.constant 0 : index
    %c0_7 = arith.constant 0 : index
    %5 = vector.load %arg3[%c0_5, %c0_6, %c0_7] : memref<1x16x128xbf16, #tpu.memory_space<vmem>>, vector<1x16x128xbf16>
    %6 = vector.shape_cast %5 : vector<1x16x128xbf16> to vector<16x128xbf16>
    %c1 = arith.constant 1 : index
    %c0_8 = arith.constant 0 : index
    %c0_9 = arith.constant 0 : index
    %7 = vector.load %arg4[%c1, %c0_8, %c0_9] : memref<2x128x256xbf16, #tpu.memory_space<vmem>>, vector<1x128x256xbf16>
    %8 = vector.shape_cast %7 : vector<1x128x256xbf16> to vector<128x256xbf16>
    %cst_10 = arith.constant dense<0.000000e+00> : vector<16x256xf32>
    %9 = tpu.matmul %6, %8, %cst_10 {dimension_numbers = #tpu.dot_dimension_numbers<[1], [0], [0], [1], [0, 0, 1, 1], [], []>} : vector<16x128xbf16>, vector<128x256xbf16>, vector<16x256xf32> -> vector<16x256xf32>
    %10 = arith.addf %4, %9 : vector<16x256xf32>
    %c0_11 = arith.constant 0 : index
    %c0_12 = arith.constant 0 : index
    %11 = vector.load %arg5[%c0_11, %c0_12] : memref<1x256xf32, #tpu.memory_space<vmem>>, vector<1x256xf32>
    %12 = vector.broadcast %11 : vector<1x256xf32> to vector<16x256xf32>
    %13 = arith.addf %10, %12 : vector<16x256xf32>
    %14 = vector.extract_strided_slice %13 {offsets = [0, 0], sizes = [16, 128], strides = [1, 1]} : vector<16x256xf32> to vector<16x128xf32>
    %15 = vector.extract_strided_slice %13 {offsets = [0, 128], sizes = [16, 128], strides = [1, 1]} : vector<16x256xf32> to vector<16x128xf32>
    %cst_13 = arith.constant 0.000000e+00 : f32
    %16 = vector.broadcast %cst_13 : f32 to vector<16x128xf32>
    %17 = arith.subf %16, %15 : vector<16x128xf32>
    %18 = math.exp %17 : vector<16x128xf32>
    %cst_14 = arith.constant 1.000000e+00 : f32
    %19 = vector.broadcast %cst_14 : f32 to vector<16x128xf32>
    %20 = arith.addf %19, %18 : vector<16x128xf32>
    %21 = tpu.reciprocal %20 {approx = true} : vector<16x128xf32> -> vector<16x128xf32>
    %22 = arith.mulf %14, %21 : vector<16x128xf32>
    %23 = arith.truncf %22 : vector<16x128xf32> to vector<16x128xbf16>
    %c0_15 = arith.constant 0 : index
    %c0_16 = arith.constant 0 : index
    %c0_17 = arith.constant 0 : index
    %24 = vector.load %arg6[%c0_15, %c0_16, %c0_17] : memref<1x16x128xbf16, #tpu.memory_space<vmem>>, vector<1x16x128xbf16>
    %25 = vector.shape_cast %24 : vector<1x16x128xbf16> to vector<16x128xbf16>
    %26 = vector.shape_cast %23 : vector<16x128xbf16> to vector<1x16x128xbf16>
    tpu.vector_store %arg6[%c0_15, %c0_16, %c0_17], %26 {strides = array<i32>} : memref<1x16x128xbf16, #tpu.memory_space<vmem>>, vector<1x16x128xbf16>,
    return
  }
  func.func @transform_0(%arg0: i32, %arg1: i32) -> (i32, i32, i32) {
    %c0_i32 = arith.constant 0 : i32
    %c0_i32_0 = arith.constant 0 : i32
    return %arg0, %arg1, %c0_i32 : i32, i32, i32
  }
  func.func @transform_1(%arg0: i32, %arg1: i32) -> (i32, i32, i32) {
    %c0_i32 = arith.constant 0 : i32
    %c0_i32_0 = arith.constant 0 : i32
    return %arg0, %arg1, %c0_i32 : i32, i32, i32
  }
  func.func @transform_2(%arg0: i32, %arg1: i32) -> (i32, i32, i32) {
    %c0_i32 = arith.constant 0 : i32
    %c0_i32_0 = arith.constant 0 : i32
    %c0_i32_1 = arith.constant 0 : i32
    %c0_i32_2 = arith.constant 0 : i32
    return %c0_i32, %c0_i32_0, %c0_i32_1 : i32, i32, i32
  }
  func.func @transform_3(%arg0: i32, %arg1: i32) -> (i32, i32) {
    %c0_i32 = arith.constant 0 : i32
    %c0_i32_0 = arith.constant 0 : i32
    %c0_i32_1 = arith.constant 0 : i32
    return %c0_i32, %c0_i32_0 : i32, i32
  }
  func.func @transform_4(%arg0: i32, %arg1: i32) -> (i32, i32, i32) {
    %c0_i32 = arith.constant 0 : i32
    %c0_i32_0 = arith.constant 0 : i32
    return %arg0, %arg1, %c0_i32 : i32, i32, i32
  }
}

</mosaic_0001>

<llo_original>
// kernel: tpu_custom_call.1
$region0: #{tpu_custom_call.1}
  #allocation0 [shape = 'u32[]', space=smem, size = 0x4, offset = 0x4, fixed_abs, tag = 'smem constant byte address 0x4 - core index']
  #allocation1 [shape = 'u32[144,128]{1,0:T(1,128)}', space=vmem, size = 0x12000, scoped, tag = 'internal scratch']
  %s0 = inlined_call_operand.hbm [shape: bf16[2,16,128], index: 0, kind: input, shape index: {}]
  %s1 = inlined_call_operand.hbm [shape: bf16[2,16,128], index: 1, kind: input, shape index: {}]
  %s2 = inlined_call_operand.hbm [shape: bf16[2,128,256], index: 2, kind: input, shape index: {}]
  %s3 = inlined_call_operand.vmem [shape: f32[1,256], index: 3, kind: input, shape index: {}]
  %s4 = inlined_call_operand.hbm [shape: bf16[2,16,128], index: 4, kind: output, shape index: {}]
  %s5 = sld [smem:[#allocation0]]
  $region61: #{tpu_custom_call.1} parent=0
    _
  %s7 = ssub.s32 1, %s5
  %s8 = scalar_select 0, %s7, %s5
  $region1: #{tpu_custom_call.1} parent=0
    #allocation2 [shape = 'u8[8192]{0}', space=vmem, size = 0x2000, scoped, tag = 'input window, operand 0']
    #allocation3 [shape = 's32[2]{0}', space=sflag, size = 0x8, scoped, tag = 'scoped memory for tpu_custom_call.1']
    #allocation4 [shape = 's32[2]{0}', space=sflag, size = 0x8, scoped, tag = 'scoped memory for tpu_custom_call.1']
    #allocation5 [shape = 'u8[8192]{0}', space=vmem, size = 0x2000, scoped, tag = 'input window, operand 1']
    #allocation6 [shape = 's32[2]{0}', space=sflag, size = 0x8, scoped, tag = 'scoped memory for tpu_custom_call.1']
    #allocation7 [shape = 'u8[131072]{0}', space=vmem, size = 0x20000, scoped, tag = 'input window, operand 2, single buffered']
    #allocation8 [shape = 'u8[8192]{0}', space=vmem, size = 0x2000, scoped, tag = 'output window, operand 0']
    %9 = vsyncpa [#allocation3], 0
    %s10 = scalar_lea.sflag [#allocation3], 1
    %11 = vsyncpa %s10, 0
    %12 = vsyncpa [#allocation6], 0
    %s13 = scalar_lea.sflag [#allocation6], 1
    %14 = vsyncpa %s13, 0
    %15 = vsyncpa [#allocation4], 0
    %s16 = scalar_lea.sflag [#allocation4], 1
    %17 = vsyncpa %s16, 0
    loop: start=0, step=1, limit=4
    $region2: #{tpu_custom_call.1} parent=1 // loop_pre_header
      _
    $region3: #{tpu_custom_call.1} parent=1 // loop_header
      %s19 = sphi 0, %s23
      %p20 = scmp.ge.s32.totalorder %s19, 4
      %s26 = sphi 0, %s38
      %s27 = sphi 0, %s34
      %s28 = sphi 0, %s26
      %s29 = sphi 0, %s27
      %s30 = sphi 0, %s28
      %s31 = sphi 0, %s29
      %s43 = sphi 0, %s45
      %s46 = sphi 0, %s43
      %s47 = sphi 0, %s46
      %s63 = sphi 0, %s47
      %s71 = sphi 0, %s73
      %s74 = sphi 0, %s71
      %s75 = sphi 0, %s74
      %s91 = sphi 0, %s75
      %s95 = sphi 0, %s95
      %s97 = sphi 0, %s95
      %s98 = sphi 0, %s97
      %s112 = sphi 0, %s98
      %s116 = sphi 0, %s116
      %s118 = sphi 0, %s116
      %s119 = sphi 0, %s118
      %s133 = sphi 0, %s119
      %s141 = sphi 0, %s143
      %s144 = sphi 0, %s141
      %s145 = sphi 0, %s144
      %s161 = sphi 0, %s145
    $region4: #{tpu_custom_call.1} parent=1 // loop_header_branch
      %22 = sbr.rel (%p20) target = $region8
    $region5: #{tpu_custom_call.1} parent=1 // loop_body
      %s24 = ssub.s32 %s19, 1
      %s25 = ssub.s32 %s19, 2
      %s32 = sadd.s32 1, %s27
      %p33 = scmp.ge.s32.totalorder %s32, 1
      %s34 = scalar_select %p33, 0, %s32
      %s35 = sadd.s32 1, %s26
      %s36 = scalar_select %p33, %s35, %s26
      %p37 = scmp.ge.s32.totalorder %s36, 2
      %s38 = scalar_select %p37, 0, %s36
      %s39 = ssub.s32 %s26, %s38
      %s40 = ssub.s32 %s27, %s34
      %s41 = sor.u32 %s39, %s40
      %p42 = scmp.eq.s32.totalorder %s41, 0
      %s44 = sadd.s32 %s43, 1
      %s45 = scalar_select %p42, %s43, %s44
      %p48 = pneg %p42
      %p49 = scmp.eq.s32.totalorder %s19, 1
      %p50 = por %p48, %p49
      %p51 = scmp.ne.s32.totalorder %s43, %s46
      %p52 = scmp.eq.s32.totalorder %s19, 0
      %p53 = por %p51, %p52
      %p54 = scmp.ne.s32.totalorder %s43, %s46
      %p55 = scmp.eq.s32.totalorder %s24, 1
      %p56 = por %p54, %p55
      %p57 = scmp.ne.s32.totalorder %s46, %s47
      %p58 = scmp.eq.s32.totalorder %s24, 0
      %p59 = por %p57, %p58
      %p60 = scmp.ne.s32.totalorder %s46, %s47
      %p61 = scmp.eq.s32.totalorder %s25, 1
      %p62 = por %p60, %p61
      %p64 = scmp.ne.s32.totalorder %s47, %s63
      %p65 = scmp.eq.s32.totalorder %s25, 0
      %p66 = por %p64, %p65
      %s67 = ssub.s32 %s26, %s38
      %s68 = ssub.s32 %s27, %s34
      %s69 = sor.u32 %s67, %s68
      %p70 = scmp.eq.s32.totalorder %s69, 0
      %s72 = sadd.s32 %s71, 1
      %s73 = scalar_select %p70, %s71, %s72
      %p76 = pneg %p70
      %p77 = scmp.eq.s32.totalorder %s19, 1
      %p78 = por %p76, %p77
      %p79 = scmp.ne.s32.totalorder %s71, %s74
      %p80 = scmp.eq.s32.totalorder %s19, 0
      %p81 = por %p79, %p80
      %p82 = scmp.ne.s32.totalorder %s71, %s74
      %p83 = scmp.eq.s32.totalorder %s24, 1
      %p84 = por %p82, %p83
      %p85 = scmp.ne.s32.totalorder %s74, %s75
      %p86 = scmp.eq.s32.totalorder %s24, 0
      %p87 = por %p85, %p86
      %p88 = scmp.ne.s32.totalorder %s74, %s75
      %p89 = scmp.eq.s32.totalorder %s25, 1
      %p90 = por %p88, %p89
      %p92 = scmp.ne.s32.totalorder %s75, %s91
      %p93 = scmp.eq.s32.totalorder %s25, 0
      %p94 = por %p92, %p93
      %s96 = sadd.s32 %s95, 1
      %p99 = scmp.eq.s32.totalorder %s19, 1
      %p100 = scmp.ne.s32.totalorder %s95, %s97
      %p101 = scmp.eq.s32.totalorder %s19, 0
      %p102 = por %p100, %p101
      %p103 = scmp.ne.s32.totalorder %s95, %s97
      %p104 = scmp.eq.s32.totalorder %s24, 1
      %p105 = por %p103, %p104
      %p106 = scmp.ne.s32.totalorder %s97, %s98
      %p107 = scmp.eq.s32.totalorder %s24, 0
      %p108 = por %p106, %p107
      %p109 = scmp.ne.s32.totalorder %s97, %s98
      %p110 = scmp.eq.s32.totalorder %s25, 1
      %p111 = por %p109, %p110
      %p113 = scmp.ne.s32.totalorder %s98, %s112
      %p114 = scmp.eq.s32.totalorder %s25, 0
      %p115 = por %p113, %p114
      %s117 = sadd.s32 %s116, 1
      %p120 = scmp.eq.s32.totalorder %s19, 1
      %p121 = scmp.ne.s32.totalorder %s116, %s118
      %p122 = scmp.eq.s32.totalorder %s19, 0
      %p123 = por %p121, %p122
      %p124 = scmp.ne.s32.totalorder %s116, %s118
      %p125 = scmp.eq.s32.totalorder %s24, 1
      %p126 = por %p124, %p125
      %p127 = scmp.ne.s32.totalorder %s118, %s119
      %p128 = scmp.eq.s32.totalorder %s24, 0
      %p129 = por %p127, %p128
      %p130 = scmp.ne.s32.totalorder %s118, %s119
      %p131 = scmp.eq.s32.totalorder %s25, 1
      %p132 = por %p130, %p131
      %p134 = scmp.ne.s32.totalorder %s119, %s133
      %p135 = scmp.eq.s32.totalorder %s25, 0
      %p136 = por %p134, %p135
      %s137 = ssub.s32 %s26, %s38
      %s138 = ssub.s32 %s27, %s34
      %s139 = sor.u32 %s137, %s138
      %p140 = scmp.eq.s32.totalorder %s139, 0
      %s142 = sadd.s32 %s141, 1
      %s143 = scalar_select %p140, %s141, %s142
      %p146 = pneg %p140
      %p147 = scmp.eq.s32.totalorder %s19, 1
      %p148 = por %p146, %p147
      %p149 = scmp.ne.s32.totalorder %s141, %s144
      %p150 = scmp.eq.s32.totalorder %s19, 0
      %p151 = por %p149, %p150
      %p152 = scmp.ne.s32.totalorder %s141, %s144
      %p153 = scmp.eq.s32.totalorder %s24, 1
      %p154 = por %p152, %p153
      %p155 = scmp.ne.s32.totalorder %s144, %s145
      %p156 = scmp.eq.s32.totalorder %s24, 0
      %p157 = por %p155, %p156
      %p158 = scmp.ne.s32.totalorder %s144, %s145
      %p159 = scmp.eq.s32.totalorder %s25, 1
      %p160 = por %p158, %p159
      %p162 = scmp.ne.s32.totalorder %s145, %s161
      %p163 = scmp.eq.s32.totalorder %s25, 0
      %p164 = por %p162, %p163
      %p165 = scmp.le.s32.totalorder 1, %s19
      %p166 = scmp.lt.s32.totalorder %s19, 3
      %p167 = pnand %p165, %p166
      %p168 = pneg %p167
      // Predicated region
      $region9: #{tpu_custom_call.1} parent=5 // pred_check
        _
      $region10: #{tpu_custom_call.1} parent=5 // pred_check_branch
        %170 = sbr.rel (%p167) target = $region12
      $region11: #{tpu_custom_call.1} parent=5 // pred_region
        %s171 = ssub.s32 %s19, 1
        // Predicated region
        $region13: #{tpu_custom_call.1} parent=11 // pred_check
          %p172 = pneg %p108
        $region14: #{tpu_custom_call.1} parent=11 // pred_check_branch
          %174 = sbr.rel (%p172) target = $region16
        $region15: #{tpu_custom_call.1} parent=11 // pred_region
          %s176 = ssub.s32 4096, 4096
          %177 = vsyncadd [#allocation6], %s176
          %s178 = sshll.u32 [#allocation7], 4
          %s179 = int_to_ptr.vmem [resolvable:$true] %s178
          %184 = dma.hbm_to_vmem [thread:$0]  %s2, 4096, %s179, [#allocation6], 128, 128, 8
        $region16: #{tpu_custom_call.1} parent=11 // pred_fallthru
          _
        // Predicated region
        $region17: #{tpu_custom_call.1} parent=11 // pred_check
          %p185 = pneg %p129
        $region18: #{tpu_custom_call.1} parent=11 // pred_check_branch
          %187 = sbr.rel (%p185) target = $region20
        $region19: #{tpu_custom_call.1} parent=11 // pred_region
          _
        $region20: #{tpu_custom_call.1} parent=11 // pred_fallthru
          _
      $region12: #{tpu_custom_call.1} parent=5 // pred_fallthru
        _
      %p188 = scmp.lt.s32.totalorder %s19, 2
      // Predicated region
      $region21: #{tpu_custom_call.1} parent=5 // pred_check
        %p189 = pneg %p188
      $region22: #{tpu_custom_call.1} parent=5 // pred_check_branch
        %191 = sbr.rel (%p189) target = $region24
      $region23: #{tpu_custom_call.1} parent=5 // pred_region
        // Predicated region
        $region25: #{tpu_custom_call.1} parent=23 // pred_check
          %p192 = pneg %p53
        $region26: #{tpu_custom_call.1} parent=23 // pred_check_branch
          %194 = sbr.rel (%p192) target = $region28
        $region27: #{tpu_custom_call.1} parent=23 // pred_region
          %s195 = sand.u32 %s43, 1
          %s196 = scalar_lea.sflag [#allocation3], %s195
          %s197 = sand.u32 %s43, 1
          %s198 = smul.addr %s197, 8
          %s199 = scalar_lea.vmem [#allocation2], %s198
          %s200 = smul.u32 2, %s27
          %s202 = ssub.s32 128, 128
          %203 = vsyncadd %s196, %s202
          %s204 = smul.addr %s26, 2
          %s205 = sadd.s32 %s200, %s204
          %s206 = smul.addr %s205, 64
          %s207 = scalar_lea.hbm %s0, %s206
          %s208 = sshll.u32 %s199, 4
          %s209 = int_to_ptr.vmem [resolvable:$true] %s208
          %214 = dma.hbm_to_vmem [thread:$0]  %s207, 128, %s209, %s196, 64, 64, 4
        $region28: #{tpu_custom_call.1} parent=23 // pred_fallthru
          _
        // Predicated region
        $region29: #{tpu_custom_call.1} parent=23 // pred_check
          %p215 = pneg %p81
        $region30: #{tpu_custom_call.1} parent=23 // pred_check_branch
          %217 = sbr.rel (%p215) target = $region32
        $region31: #{tpu_custom_call.1} parent=23 // pred_region
          %s218 = sand.u32 %s19, 1
          %s219 = scalar_lea.sflag [#allocation6], %s218
          %s220 = sand.u32 %s71, 1
          %s221 = smul.addr %s220, 8
          %s222 = scalar_lea.vmem [#allocation5], %s221
          %s223 = smul.u32 2, %s27
          %s225 = ssub.s32 128, 128
          %226 = vsyncadd %s219, %s225
          %s227 = smul.addr %s26, 2
          %s228 = sadd.s32 %s223, %s227
          %s229 = smul.addr %s228, 64
          %s230 = scalar_lea.hbm %s1, %s229
          %s231 = sshll.u32 %s222, 4
          %s232 = int_to_ptr.vmem [resolvable:$true] %s231
          %237 = dma.hbm_to_vmem [thread:$0]  %s230, 128, %s232, %s219, 64, 64, 4
        $region32: #{tpu_custom_call.1} parent=23 // pred_fallthru
          _
      $region24: #{tpu_custom_call.1} parent=5 // pred_fallthru
        _
      %p238 = scmp.le.s32.totalorder 1, %s19
      %p239 = scmp.lt.s32.totalorder %s19, 3
      %p240 = pnand %p238, %p239
      %p241 = pneg %p240
      // Predicated region
      $region33: #{tpu_custom_call.1} parent=5 // pred_check
        _
      $region34: #{tpu_custom_call.1} parent=5 // pred_check_branch
        %243 = sbr.rel (%p240) target = $region36
      $region35: #{tpu_custom_call.1} parent=5 // pred_region
        %s244 = ssub.s32 %s19, 1
        %s245 = sand.u32 %s46, 1
        %s246 = scalar_lea.sflag [#allocation3], %s245
        %s247 = sand.u32 %s46, 1
        %s248 = smul.addr %s247, 8
        %s249 = scalar_lea.vmem [#allocation2], %s248
        // Predicated region
        $region37: #{tpu_custom_call.1} parent=35 // pred_check
          %p250 = pneg %p59
        $region38: #{tpu_custom_call.1} parent=35 // pred_check_branch
          %252 = sbr.rel (%p250) target = $region40
        $region39: #{tpu_custom_call.1} parent=35 // pred_region
          %253 = dma.done %s246, 128
        $region40: #{tpu_custom_call.1} parent=35 // pred_fallthru
          _
        %s254 = sand.u32 %s24, 1
        %s255 = scalar_lea.sflag [#allocation6], %s254
        %s256 = sand.u32 %s74, 1
        %s257 = smul.addr %s256, 8
        %s258 = scalar_lea.vmem [#allocation5], %s257
        // Predicated region
        $region41: #{tpu_custom_call.1} parent=35 // pred_check
          %p259 = pneg %p87
        $region42: #{tpu_custom_call.1} parent=35 // pred_check_branch
          %261 = sbr.rel (%p259) target = $region44
        $region43: #{tpu_custom_call.1} parent=35 // pred_region
          %262 = dma.done %s255, 128
        $region44: #{tpu_custom_call.1} parent=35 // pred_fallthru
          _
        // Predicated region
        $region45: #{tpu_custom_call.1} parent=35 // pred_check
          %p263 = pneg %p108
        $region46: #{tpu_custom_call.1} parent=35 // pred_check_branch
          %265 = sbr.rel (%p263) target = $region48
        $region47: #{tpu_custom_call.1} parent=35 // pred_region
          %266 = dma.done [#allocation6], 4096
        $region48: #{tpu_custom_call.1} parent=35 // pred_fallthru
          _
        %s267 = sand.u32 %s46, 1
        %s268 = scalar_lea.sflag [#allocation3], %s267
        %s269 = sand.u32 %s46, 1
        %s270 = smul.addr %s269, 8
        %s271 = scalar_lea.vmem [#allocation2], %s270
        %p272 = pneg %p59
        %p273 = pneg %p56
        %s274 = sand.u32 %s24, 1
        %s275 = scalar_lea.sflag [#allocation6], %s274
        %s276 = sand.u32 %s74, 1
        %s277 = smul.addr %s276, 8
        %s278 = scalar_lea.vmem [#allocation5], %s277
        %p279 = pneg %p87
        %p280 = pneg %p84
        %p281 = pneg %p108
        %p282 = pneg %p105
        %p283 = pneg %p129
        %p284 = pneg %p126
        %p285 = pneg %p157
        %p286 = pneg %p154
        %s287 = sand.u32 %s144, 1
        %s288 = scalar_lea.sflag [#allocation4], %s287
        %s289 = sand.u32 %s144, 1
        %s290 = smul.addr %s289, 8
        %s291 = scalar_lea.vmem [#allocation8], %s290
        %s292 = smul.u32 2, %s29
        %s293 = smul.u32 2, %s29
        %s294 = smul.u32 2, %s29
        %v296 = vld [vmem:[%s249] sm:$0xf]
        %v297 = vld [vmem:[%s249 + $0x4] sm:$0xf]
        %v298 = vld [vmem:[#allocation7] sm:$0xff]
        %v299 = vld [vmem:[#allocation7 + $0x8] sm:$0xff]
        %v300 = vld [vmem:[#allocation7 + $0x10] sm:$0xff]
        %v301 = vld [vmem:[#allocation7 + $0x18] sm:$0xff]
        %v302 = vld [vmem:[#allocation7 + $0x20] sm:$0xff]
        %v303 = vld [vmem:[#allocation7 + $0x28] sm:$0xff]
        %v304 = vld [vmem:[#allocation7 + $0x30] sm:$0xff]
        %v305 = vld [vmem:[#allocation7 + $0x38] sm:$0xff]
        %v306 = vld [vmem:[#allocation7 + $0x40] sm:$0xff]
        %v307 = vld [vmem:[#allocation7 + $0x48] sm:$0xff]
        %v308 = vld [vmem:[#allocation7 + $0x50] sm:$0xff]
        %v309 = vld [vmem:[#allocation7 + $0x58] sm:$0xff]
        %v310 = vld [vmem:[#allocation7 + $0x60] sm:$0xff]
        %v311 = vld [vmem:[#allocation7 + $0x68] sm:$0xff]
        %v312 = vld [vmem:[#allocation7 + $0x70] sm:$0xff]
        %v313 = vld [vmem:[#allocation7 + $0x78] sm:$0xff]
        %v314 = vld [vmem:[%s258] sm:$0xf]
        %v315 = vld [vmem:[%s258 + $0x4] sm:$0xf]
        %s316 = scalar_lea.vmem [#allocation7], 128
        %v317 = vld [vmem:[%s316] sm:$0xff]
        %v318 = vld [vmem:[%s316 + $0x8] sm:$0xff]
        %v319 = vld [vmem:[%s316 + $0x10] sm:$0xff]
        %v320 = vld [vmem:[%s316 + $0x18] sm:$0xff]
        %v321 = vld [vmem:[%s316 + $0x20] sm:$0xff]
        %v322 = vld [vmem:[%s316 + $0x28] sm:$0xff]
        %v323 = vld [vmem:[%s316 + $0x30] sm:$0xff]
        %v324 = vld [vmem:[%s316 + $0x38] sm:$0xff]
        %v325 = vld [vmem:[%s316 + $0x40] sm:$0xff]
        %v326 = vld [vmem:[%s316 + $0x48] sm:$0xff]
        %v327 = vld [vmem:[%s316 + $0x50] sm:$0xff]
        %v328 = vld [vmem:[%s316 + $0x58] sm:$0xff]
        %v329 = vld [vmem:[%s316 + $0x60] sm:$0xff]
        %v330 = vld [vmem:[%s316 + $0x68] sm:$0xff]
        %v331 = vld [vmem:[%s316 + $0x70] sm:$0xff]
        %v332 = vld [vmem:[%s316 + $0x78] sm:$0xff]
        %v335 = vunpack.c.l.b16 %v314
        %v336 = vunpack.c.l.b16 %v315
        %v337 = vpack.c.b16 %v336, %v335
        %v355 = vunpack.c.l.b16 %v317
        %v356 = vunpack.c.h.b16 %v317
        %v357 = vunpack.c.l.b16 %v318
        %v358 = vunpack.c.h.b16 %v318
        %v359 = vunpack.c.l.b16 %v319
        %v360 = vunpack.c.h.b16 %v319
        %v361 = vunpack.c.l.b16 %v320
        %v362 = vunpack.c.h.b16 %v320
        %v363 = vunpack.c.l.b16 %v321
        %v364 = vunpack.c.h.b16 %v321
        %v365 = vunpack.c.l.b16 %v322
        %v366 = vunpack.c.h.b16 %v322
        %v367 = vunpack.c.l.b16 %v323
        %v368 = vunpack.c.h.b16 %v323
        %v369 = vunpack.c.l.b16 %v324
        %v370 = vunpack.c.h.b16 %v324
        %v371 = vunpack.c.l.b16 %v325
        %v372 = vunpack.c.h.b16 %v325
        %v373 = vunpack.c.l.b16 %v326
        %v374 = vunpack.c.h.b16 %v326
        %v375 = vunpack.c.l.b16 %v327
        %v376 = vunpack.c.h.b16 %v327
        %v377 = vunpack.c.l.b16 %v328
        %v378 = vunpack.c.h.b16 %v328
        %v379 = vunpack.c.l.b16 %v329
        %v380 = vunpack.c.h.b16 %v329
        %v381 = vunpack.c.l.b16 %v330
        %v382 = vunpack.c.h.b16 %v330
        %v383 = vunpack.c.l.b16 %v331
        %v384 = vunpack.c.h.b16 %v331
        %v385 = vunpack.c.l.b16 %v332
        %v386 = vunpack.c.h.b16 %v332
        %v387 = vpack.c.b16 %v357, %v355
        %v388 = vpack.c.b16 %v358, %v356
        %v389 = vpack.c.b16 %v361, %v359
        %v390 = vpack.c.b16 %v362, %v360
        %v391 = vpack.c.b16 %v365, %v363
        %v392 = vpack.c.b16 %v366, %v364
        %v393 = vpack.c.b16 %v369, %v367
        %v394 = vpack.c.b16 %v370, %v368
        %v395 = vpack.c.b16 %v373, %v371
        %v396 = vpack.c.b16 %v374, %v372
        %v397 = vpack.c.b16 %v377, %v375
        %v398 = vpack.c.b16 %v378, %v376
        %v399 = vpack.c.b16 %v381, %v379
        %v400 = vpack.c.b16 %v382, %v380
        %v401 = vpack.c.b16 %v385, %v383
        %v402 = vpack.c.b16 %v386, %v384
        %419 = vmatprep.subr.bf16.mxu0 %v388
        %420 = vmatpush1.bf16.msra.mxu0 %v387
        %421 = vmatprep.subr.bf16.mxu0 %v390
        %422 = vmatpush1.bf16.msra.mxu0 %v389
        %423 = vmatprep.subr.bf16.mxu0 %v392
        %424 = vmatpush1.bf16.msra.mxu0 %v391
        %425 = vmatprep.subr.bf16.mxu0 %v394
        %426 = vmatpush1.bf16.msra.mxu0 %v393
        %427 = vmatprep.subr.bf16.mxu0 %v396
        %428 = vmatpush1.bf16.msra.mxu0 %v395
        %429 = vmatprep.subr.bf16.mxu0 %v398
        %430 = vmatpush1.bf16.msra.mxu0 %v397
        %431 = vmatprep.subr.bf16.mxu0 %v400
        %432 = vmatpush1.bf16.msra.mxu0 %v399
        %433 = vmatprep.subr.bf16.mxu0 %v402
        %434 = vmatpush1.bf16.msra.mxu0 %v401
        %435 = vmatprep.subr.bf16.mxu0 0
        %436 = vmatpush1.bf16.msra.mxu0 0
        %437 = vmatprep.subr.bf16.mxu0 0
        %438 = vmatpush1.bf16.msra.mxu0 0
        %439 = vmatprep.subr.bf16.mxu0 0
        %440 = vmatpush1.bf16.msra.mxu0 0
        %441 = vmatprep.subr.bf16.mxu0 0
        %442 = vmatpush1.bf16.msra.mxu0 0
        %443 = vmatprep.subr.bf16.mxu0 0
        %444 = vmatpush1.bf16.msra.mxu0 0
        %445 = vmatprep.subr.bf16.mxu0 0
        %446 = vmatpush1.bf16.msra.mxu0 0
        %447 = vmatprep.subr.bf16.mxu0 0
        %448 = vmatpush1.bf16.msra.mxu0 0
        %449 = vmatprep.subr.bf16.mxu0 0
        %450 = vmatpush1.bf16.msra.mxu0 0
        %451 = vmatprep.mubr.bf16.mxu0 0
        %452 = vmatmul.mubr.bf16.gmra.mrb[0].mxu0 %v337
        %v453 = vpop.f32.mrb[0].mxu0
        %v454 = vadd.f32 0.0, %v453
        %v455 = vpop.f32.mrb[0].mxu0
        %v456 = vadd.f32 0.0, %v455
        %v457 = vpop.f32.mrb[0].mxu0
        %v458 = vadd.f32 0.0, %v457
        %v459 = vpop.f32.mrb[0].mxu0
        %v460 = vadd.f32 0.0, %v459
        %461 = vdwg.mxu0
        %v464 = vunpack.c.l.b16 %v296
        %v465 = vunpack.c.l.b16 %v297
        %v466 = vpack.c.b16 %v465, %v464
        %v484 = vunpack.c.l.b16 %v298
        %v485 = vunpack.c.h.b16 %v298
        %v486 = vunpack.c.l.b16 %v299
        %v487 = vunpack.c.h.b16 %v299
        %v488 = vunpack.c.l.b16 %v300
        %v489 = vunpack.c.h.b16 %v300
        %v490 = vunpack.c.l.b16 %v301
        %v491 = vunpack.c.h.b16 %v301
        %v492 = vunpack.c.l.b16 %v302
        %v493 = vunpack.c.h.b16 %v302
        %v494 = vunpack.c.l.b16 %v303
        %v495 = vunpack.c.h.b16 %v303
        %v496 = vunpack.c.l.b16 %v304
        %v497 = vunpack.c.h.b16 %v304
        %v498 = vunpack.c.l.b16 %v305
        %v499 = vunpack.c.h.b16 %v305
        %v500 = vunpack.c.l.b16 %v306
        %v501 = vunpack.c.h.b16 %v306
        %v502 = vunpack.c.l.b16 %v307
        %v503 = vunpack.c.h.b16 %v307
        %v504 = vunpack.c.l.b16 %v308
        %v505 = vunpack.c.h.b16 %v308
        %v506 = vunpack.c.l.b16 %v309
        %v507 = vunpack.c.h.b16 %v309
        %v508 = vunpack.c.l.b16 %v310
        %v509 = vunpack.c.h.b16 %v310
        %v510 = vunpack.c.l.b16 %v311
        %v511 = vunpack.c.h.b16 %v311
        %v512 = vunpack.c.l.b16 %v312
        %v513 = vunpack.c.h.b16 %v312
        %v514 = vunpack.c.l.b16 %v313
        %v515 = vunpack.c.h.b16 %v313
        %v516 = vpack.c.b16 %v486, %v484
        %v517 = vpack.c.b16 %v487, %v485
        %v518 = vpack.c.b16 %v490, %v488
        %v519 = vpack.c.b16 %v491, %v489
        %v520 = vpack.c.b16 %v494, %v492
        %v521 = vpack.c.b16 %v495, %v493
        %v522 = vpack.c.b16 %v498, %v496
        %v523 = vpack.c.b16 %v499, %v497
        %v524 = vpack.c.b16 %v502, %v500
        %v525 = vpack.c.b16 %v503, %v501
        %v526 = vpack.c.b16 %v506, %v504
        %v527 = vpack.c.b16 %v507, %v505
        %v528 = vpack.c.b16 %v510, %v508
        %v529 = vpack.c.b16 %v511, %v509
        %v530 = vpack.c.b16 %v514, %v512
        %v531 = vpack.c.b16 %v515, %v513
        %548 = vmatprep.subr.bf16.mxu0 %v517
        %549 = vmatpush1.bf16.msra.mxu0 %v516
        %550 = vmatprep.subr.bf16.mxu0 %v519
        %551 = vmatpush1.bf16.msra.mxu0 %v518
        %552 = vmatprep.subr.bf16.mxu0 %v521
        %553 = vmatpush1.bf16.msra.mxu0 %v520
        %554 = vmatprep.subr.bf16.mxu0 %v523
        %555 = vmatpush1.bf16.msra.mxu0 %v522
        %556 = vmatprep.subr.bf16.mxu0 %v525
        %557 = vmatpush1.bf16.msra.mxu0 %v524
        %558 = vmatprep.subr.bf16.mxu0 %v527
        %559 = vmatpush1.bf16.msra.mxu0 %v526
        %560 = vmatprep.subr.bf16.mxu0 %v529
        %561 = vmatpush1.bf16.msra.mxu0 %v528
        %562 = vmatprep.subr.bf16.mxu0 %v531
        %563 = vmatpush1.bf16.msra.mxu0 %v530
        %564 = vmatprep.subr.bf16.mxu0 0
        %565 = vmatpush1.bf16.msra.mxu0 0
        %566 = vmatprep.subr.bf16.mxu0 0
        %567 = vmatpush1.bf16.msra.mxu0 0
        %568 = vmatprep.subr.bf16.mxu0 0
        %569 = vmatpush1.bf16.msra.mxu0 0
        %570 = vmatprep.subr.bf16.mxu0 0
        %571 = vmatpush1.bf16.msra.mxu0 0
        %572 = vmatprep.subr.bf16.mxu0 0
        %573 = vmatpush1.bf16.msra.mxu0 0
        %574 = vmatprep.subr.bf16.mxu0 0
        %575 = vmatpush1.bf16.msra.mxu0 0
        %576 = vmatprep.subr.bf16.mxu0 0
        %577 = vmatpush1.bf16.msra.mxu0 0
        %578 = vmatprep.subr.bf16.mxu0 0
        %579 = vmatpush1.bf16.msra.mxu0 0
        %580 = vmatprep.mubr.bf16.mxu0 0
        %581 = vmatmul.mubr.bf16.gmra.mrb[0].mxu0 %v466
        %v582 = vpop.f32.mrb[0].mxu0
        %v583 = vadd.f32 %v454, %v582
        %v584 = vpop.f32.mrb[0].mxu0
        %v585 = vadd.f32 %v456, %v584
        %v586 = vpop.f32.mrb[0].mxu0
        %v587 = vadd.f32 %v458, %v586
        %v588 = vpop.f32.mrb[0].mxu0
        %v589 = vadd.f32 %v460, %v588
        %590 = vdwg.mxu0
        %v591 = vld [vmem:[%s3] sm:$0x3]
        %v593 = vlaneseq
        %v594 = vshrl.u32 %v593, 7
        %v595 = vsub.s32 0, %v594
        %v596 = vrot.slane %v591, %v595
        %v597 = vlaneseq
        %v598 = vshrl.u32 %v597, 7
        %v599 = vsub.s32 1, %v598
        %v600 = vrot.slane %v591, %v599
        %v603 = vadd.f32 %v583, %v596
        %v604 = vadd.f32 %v585, %v600
        %v605 = vadd.f32 %v587, %v596
        %v606 = vadd.f32 %v589, %v600
        %v607 = vsub.f32 0.0, %v604
        %v608 = vsub.f32 0.0, %v606
        %v609 = vmul.f32 %v607, 1.442695
        %v610 = vpow.pop %v609
        %v611 = vmul.f32 %v608, 1.442695
        %v612 = vpow.pop %v611
        %v613 = vadd.f32 %v610, 1.0
        %v614 = vadd.f32 %v612, 1.0
        %v615 = vrcp.pop %v613
        %v616 = vrcp.pop %v614
        %v617 = vmul.f32 %v603, %v615
        %v618 = vmul.f32 %v605, %v616
        %v619 = vpack.c.bf16 %v618, %v617
        %v621 = vunpack.c.l.b16 %v619
        %v622 = vunpack.c.h.b16 %v619
        %v623 = vpack.c.b16 %v621, %v621
        %v624 = vpack.c.b16 %v622, %v622
        %627 = vst [vmem:[%s291] sm:$0xf] %v623
        %628 = vst [vmem:[%s291 + $0x4] sm:$0xf] %v624
        %s629 = sand.u32 %s144, 1
        %s630 = scalar_lea.sflag [#allocation4], %s629
        %s631 = sand.u32 %s144, 1
        %s632 = smul.addr %s631, 8
        %s633 = scalar_lea.vmem [#allocation8], %s632
        // Predicated region
        $region49: #{tpu_custom_call.1} parent=35 // pred_check
          %p634 = pneg %p154
        $region50: #{tpu_custom_call.1} parent=35 // pred_check_branch
          %636 = sbr.rel (%p634) target = $region52
        $region51: #{tpu_custom_call.1} parent=35 // pred_region
          %s637 = smul.u32 2, %s29
          %s639 = ssub.s32 128, 128
          %640 = vsyncadd %s630, %s639
          %s641 = smul.addr %s28, 2
          %s642 = sadd.s32 %s637, %s641
          %s643 = smul.addr %s642, 64
          %s644 = scalar_lea.hbm %s4, %s643
          %s645 = sshll.u32 %s633, 4
          %s646 = int_to_ptr.vmem [resolvable:$true] %s645
          %651 = dma.vmem_to_hbm [thread:$0]  %s646, 128, %s644, %s630, 64, 64, 4
        $region52: #{tpu_custom_call.1} parent=35 // pred_fallthru
          _
      $region36: #{tpu_custom_call.1} parent=5 // pred_fallthru
        _
      %p652 = scmp.le.s32.totalorder 2, %s19
      // Predicated region
      $region53: #{tpu_custom_call.1} parent=5 // pred_check
        %p653 = pneg %p652
      $region54: #{tpu_custom_call.1} parent=5 // pred_check_branch
        %655 = sbr.rel (%p653) target = $region56
      $region55: #{tpu_custom_call.1} parent=5 // pred_region
        %s656 = ssub.s32 %s19, 2
        // Predicated region
        $region57: #{tpu_custom_call.1} parent=55 // pred_check
          %p657 = pneg %p160
        $region58: #{tpu_custom_call.1} parent=55 // pred_check_branch
          %659 = sbr.rel (%p657) target = $region60
        $region59: #{tpu_custom_call.1} parent=55 // pred_region
          %s660 = sand.u32 %s145, 1
          %s661 = scalar_lea.sflag [#allocation4], %s660
          %s662 = sand.u32 %s145, 1
          %s663 = smul.addr %s662, 8
          %s664 = scalar_lea.vmem [#allocation8], %s663
          %665 = dma.done %s661, 128
        $region60: #{tpu_custom_call.1} parent=55 // pred_fallthru
          _
      $region56: #{tpu_custom_call.1} parent=5 // pred_fallthru
        _
    $region6: #{tpu_custom_call.1} parent=1 // loop_footer
      %s23 = sadd.s32 1, %s19
    $region7: #{tpu_custom_call.1} parent=1 // loop_footer_branch
      %18 = sbr.rel target = $region3
    $region8: #{tpu_custom_call.1} parent=1 // loop_exit
      _
    %666 = vsyncpa [#allocation3], 1
    %s667 = scalar_lea.sflag [#allocation3], 1
    %668 = vsyncpa %s667, 1
    %669 = vsyncpa [#allocation6], 1
    %s670 = scalar_lea.sflag [#allocation6], 1
    %671 = vsyncpa %s670, 1
    %672 = vsyncpa [#allocation4], 1
    %s673 = scalar_lea.sflag [#allocation4], 1
    %674 = vsyncpa %s673, 1

</llo_original>
